<compile_context>
chip_gen: v7x
topology: tpu7x:2x2x1
jax: 0.10.0
libtpu: 0.0.40
codegen_flags: <defaults>
</compile_context>

<pallas_src>
import jax
import jax.numpy as jnp
from jax.experimental import pallas as pl
from jax.experimental.pallas import tpu as pltpu


def _round_up(x, m):
    return ((x + m - 1) // m) * m


# ----------------------------------------------------------------------------
# Parameter packing (done once, offline): weights stored (fan_out, fan_in) with
# the bias folded in as the column right after the weight block.  Padded to a
# (3, 56, 128) lane-aligned slab so the kernel sees a single input operand.
# ----------------------------------------------------------------------------
def pack_params(params, dims):
    d_in, h1, h2, d_out = dims
    rows = _round_up(max(h1, h2, d_out), 8)        # fan_out on sublanes
    cols = _round_up(max(d_in, h1, h2) + 1, 128)   # fan_in (+1 bias col) on lanes
    packed = jnp.zeros((3, rows, cols), jnp.float32)
    layers = (
        (params["w1"], params["b1"], d_in, h1),
        (params["w2"], params["b2"], h1, h2),
        (params["w3"], params["b3"], h2, d_out),
    )
    for idx, (w, b, fi, fo) in enumerate(layers):
        packed = packed.at[idx, :fo, :fi].set(w.T)           # (fan_out, fan_in)
        packed = packed.at[idx, :fo, fi].set(b.reshape(-1))  # bias column
    return packed


# ----------------------------------------------------------------------------
# Kernel: one batch tile, all three layers fused, batch on the lane dim.
# ----------------------------------------------------------------------------
def _make_kernel(dims):
    d_in, h1, h2, d_out = dims
    layer_dims = ((0, d_in, h1, True), (1, h1, h2, True), (2, h2, d_out, False))

    def kernel(xT_ref, p_ref, yT_ref):
        a = xT_ref[...]                                   # (d_in, TB) f32
        for idx, fan_in, fan_out, relu in layer_dims:     # unrolled at trace time
            slab = p_ref[idx]                             # (rows, cols) — tiny load
            w = slab[:fan_out, :fan_in]                   # static slices
            b = slab[:fan_out, fan_in:fan_in + 1]         # (fan_out, 1)
            y = jnp.dot(w, a, preferred_element_type=jnp.float32) + b
            a = jnp.maximum(y, 0.0) if relu else y
        yT_ref[...] = a.astype(yT_ref.dtype)              # (d_out, TB) lane-dense

    return kernel


# ----------------------------------------------------------------------------
# Batch-tile selection: lane-pad B to a multiple of 128, use one big tile when
# it fits, otherwise the largest tile whose padding overhead stays <= ~12.5%.
# ----------------------------------------------------------------------------
def _choose_batch_tile(B, max_tile):
    b128 = _round_up(B, 128)
    if b128 <= max_tile:
        return b128, b128                       # single grid step
    budget = (b128 * 9) // 8                    # at most ~12.5% extra padding
    for tb in (4096, 2048, 1024, 512, 256, 128):
        if tb <= max_tile and _round_up(B, tb) <= budget:
            return tb, _round_up(B, tb)
    return 128, b128


# ----------------------------------------------------------------------------
# Forward wrapper
# ----------------------------------------------------------------------------
def reduced_encoder_forward(x, packed_params, dims, *, max_batch_tile=2048):
    """x: (B, d_in) f32. packed_params: output of pack_params. dims: (d_in,h1,h2,d_out)."""
    d_in, h1, h2, d_out = dims
    B = x.shape[0]
    TB, B_pad = _choose_batch_tile(B, max_batch_tile)

    # Layout plumbing (cheap XLA ops): batch onto the lane dim, pad to TB grid.
    xT = x.T                                              # (d_in, B)
    if B_pad != B:
        xT = jnp.pad(xT, ((0, 0), (0, B_pad - B)))

    n_slabs, rows, cols = packed_params.shape
    yT = pl.pallas_call(
        _make_kernel(dims),
        out_shape=jax.ShapeDtypeStruct((d_out, B_pad), jnp.float32),
        grid=(B_pad // TB,),
        in_specs=[
            # activations: tiled along the batch (lane) axis
            pl.BlockSpec((d_in, TB), lambda i: (0, i)),
            # packed weights: constant block index -> resident, no re-DMA
            pl.BlockSpec((n_slabs, rows, cols), lambda i: (0, 0, 0)),
        ],
        out_specs=pl.BlockSpec((d_out, TB), lambda i: (0, i)),
        compiler_params=pltpu.CompilerParams(
            # no carried state -> batch axis is truly parallel (v7x megacore)
            dimension_semantics=("parallel",),
            vmem_limit_bytes=32 * 1024 * 1024,
        ),
    )(xT, packed_params)

    # Epilogue (XLA): drop padded columns, global power normalization, restore
    # the (B, d_out) layout.  mean over all elements of y == mean over yT.
    yT = yT[:, :B]
    scale = 1.0 / jnp.sqrt(2.0 * jnp.mean(yT * yT))
    return (yT * scale).T


# ----------------------------------------------------------------------------
# Init / reference (nn.Linear-style U(-1/sqrt(fan_in), +1/sqrt(fan_in)) init)
# ----------------------------------------------------------------------------
def init_params(key, input_size, hidden_size_1, hidden_size_2, out_size=8):
    def linear(key, fan_in, fan_out):
        kw, kb = jax.random.split(key)
        bound = 1.0 / (fan_in ** 0.5)
        w = jax.random.uniform(kw, (fan_in, fan_out), jnp.float32, -bound, bound)
        b = jax.random.uniform(kb, (1, fan_out), jnp.float32, -bound, bound)
        return w, b

    k1, k2, k3 = jax.random.split(key, 3)
    w1, b1 = linear(k1, input_size, hidden_size_1)
    w2, b2 = linear(k2, hidden_size_1, hidden_size_2)
    w3, b3 = linear(k3, hidden_size_2, out_size)
    return {"w1": w1, "b1": b1, "w2": w2, "b2": b2, "w3": w3, "b3": b3}


def reference_forward(x, p):
    h1 = jnp.maximum(x @ p["w1"] + p["b1"], 0.0)
    h2 = jnp.maximum(h1 @ p["w2"] + p["b2"], 0.0)
    y = h2 @ p["w3"] + p["b3"]
    return y / jnp.sqrt(2.0 * jnp.mean(y ** 2))


if __name__ == "__main__":
    # Pruned sizes implied by the module (M=16, NN_T=64, minus "insignificant" units).
    input_size = 12      # 16 - 4 pruned input features
    hidden_size_1 = 56   # 64 - 8 pruned fc2 units
    hidden_size_2 = 48   # 64 - 16 pruned fc3 units
    out_size = 8
    dims = (input_size, hidden_size_1, hidden_size_2, out_size)

    key = jax.random.PRNGKey(0)
    k_param, k_x1, k_x2 = jax.random.split(key, 3)
    params = init_params(k_param, input_size, hidden_size_1, hidden_size_2, out_size)
    packed = pack_params(params, dims)   # pack ONCE; reused by every forward call

    # 1) Small batch (the module's own regime): lane-padded to 128, single grid step.
    x_small = jax.random.normal(k_x1, (8, input_size), jnp.float32)
    out_small = jax.block_until_ready(reduced_encoder_forward(x_small, packed, dims))
    ref_small = reference_forward(x_small, params)
    assert out_small.shape == (8, out_size)
    assert jnp.allclose(out_small, ref_small, atol=1e-5, rtol=1e-4), "small-batch mismatch"

    # 2) Non-divisible batch with a forced small tile: pads 300 -> 384, 3 parallel
    #    grid steps, resident weights, lane-dense stores, XLA-side normalization.
    x_big = jax.random.normal(k_x2, (300, input_size), jnp.float32)
    out_big = jax.block_until_ready(
        reduced_encoder_forward(x_big, packed, dims, max_batch_tile=128))
    ref_big = reference_forward(x_big, params)
    assert out_big.shape == (300, out_size)
    assert jnp.allclose(out_big, ref_big, atol=1e-5, rtol=1e-4), "batched mismatch"

    print("KERNEL_OK")
</pallas_src>

<mosaic_0001>
module attributes {stable_mosaic.version = 11 : i64} {
  func.func @kernel(%arg0: i32, %arg1: memref<12x128xf32, #tpu.memory_space<vmem>>, %arg2: memref<3x56x128xf32, #tpu.memory_space<vmem>>, %arg3: memref<8x128xf32, #tpu.memory_space<vmem>>) attributes {dimension_semantics = [#tpu.dimension_semantics<parallel>], iteration_bounds = array<i64: 1>, scalar_prefetch = 0 : i64, scratch_operands = 0 : i64, tpu.core_type = #tpu.core_type<tc>, window_params = [{transform_indices = @transform_0, window_bounds = array<i64: 12, 128>}, {pipeline_mode = #tpu.pipeline_mode<synchronous>, transform_indices = @transform_1, window_bounds = array<i64: 3, 56, 128>}, {transform_indices = @transform_2, window_bounds = array<i64: 8, 128>}]} {
    %c0 = arith.constant 0 : index
    %c0_0 = arith.constant 0 : index
    %0 = vector.load %arg1[%c0, %c0_0] : memref<12x128xf32, #tpu.memory_space<vmem>>, vector<12x128xf32>
    %c0_1 = arith.constant 0 : index
    %c0_2 = arith.constant 0 : index
    %c0_3 = arith.constant 0 : index
    %1 = vector.load %arg2[%c0_1, %c0_2, %c0_3] : memref<3x56x128xf32, #tpu.memory_space<vmem>>, vector<1x56x128xf32>
    %2 = vector.shape_cast %1 : vector<1x56x128xf32> to vector<56x128xf32>
    %3 = vector.extract_strided_slice %2 {offsets = [0, 0], sizes = [56, 12], strides = [1, 1]} : vector<56x128xf32> to vector<56x12xf32>
    %4 = vector.extract_strided_slice %2 {offsets = [0, 12], sizes = [56, 1], strides = [1, 1]} : vector<56x128xf32> to vector<56x1xf32>
    %cst = arith.constant dense<0.000000e+00> : vector<56x128xf32>
    %5 = tpu.matmul %3, %0, %cst {dimension_numbers = #tpu.dot_dimension_numbers<[1], [0], [0], [1], [0, 0, 1, 1], [], []>} : vector<56x12xf32>, vector<12x128xf32>, vector<56x128xf32> -> vector<56x128xf32>
    %6 = vector.broadcast %4 : vector<56x1xf32> to vector<56x128xf32>
    %7 = arith.addf %5, %6 : vector<56x128xf32>
    %cst_4 = arith.constant 0.000000e+00 : f32
    %8 = vector.broadcast %cst_4 : f32 to vector<56x128xf32>
    %9 = arith.maximumf %7, %8 : vector<56x128xf32>
    %c1 = arith.constant 1 : index
    %c0_5 = arith.constant 0 : index
    %c0_6 = arith.constant 0 : index
    %10 = vector.load %arg2[%c1, %c0_5, %c0_6] : memref<3x56x128xf32, #tpu.memory_space<vmem>>, vector<1x56x128xf32>
    %11 = vector.shape_cast %10 : vector<1x56x128xf32> to vector<56x128xf32>
    %12 = vector.extract_strided_slice %11 {offsets = [0, 0], sizes = [48, 56], strides = [1, 1]} : vector<56x128xf32> to vector<48x56xf32>
    %13 = vector.extract_strided_slice %11 {offsets = [0, 56], sizes = [48, 1], strides = [1, 1]} : vector<56x128xf32> to vector<48x1xf32>
    %cst_7 = arith.constant dense<0.000000e+00> : vector<48x128xf32>
    %14 = tpu.matmul %12, %9, %cst_7 {dimension_numbers = #tpu.dot_dimension_numbers<[1], [0], [0], [1], [0, 0, 1, 1], [], []>} : vector<48x56xf32>, vector<56x128xf32>, vector<48x128xf32> -> vector<48x128xf32>
    %15 = vector.broadcast %13 : vector<48x1xf32> to vector<48x128xf32>
    %16 = arith.addf %14, %15 : vector<48x128xf32>
    %cst_8 = arith.constant 0.000000e+00 : f32
    %17 = vector.broadcast %cst_8 : f32 to vector<48x128xf32>
    %18 = arith.maximumf %16, %17 : vector<48x128xf32>
    %c2 = arith.constant 2 : index
    %c0_9 = arith.constant 0 : index
    %c0_10 = arith.constant 0 : index
    %19 = vector.load %arg2[%c2, %c0_9, %c0_10] : memref<3x56x128xf32, #tpu.memory_space<vmem>>, vector<1x56x128xf32>
    %20 = vector.shape_cast %19 : vector<1x56x128xf32> to vector<56x128xf32>
    %21 = vector.extract_strided_slice %20 {offsets = [0, 0], sizes = [8, 48], strides = [1, 1]} : vector<56x128xf32> to vector<8x48xf32>
    %22 = vector.extract_strided_slice %20 {offsets = [0, 48], sizes = [8, 1], strides = [1, 1]} : vector<56x128xf32> to vector<8x1xf32>
    %cst_11 = arith.constant dense<0.000000e+00> : vector<8x128xf32>
    %23 = tpu.matmul %21, %18, %cst_11 {dimension_numbers = #tpu.dot_dimension_numbers<[1], [0], [0], [1], [0, 0, 1, 1], [], []>} : vector<8x48xf32>, vector<48x128xf32>, vector<8x128xf32> -> vector<8x128xf32>
    %24 = vector.broadcast %22 : vector<8x1xf32> to vector<8x128xf32>
    %25 = arith.addf %23, %24 : vector<8x128xf32>
    %c0_12 = arith.constant 0 : index
    %c0_13 = arith.constant 0 : index
    %26 = vector.load %arg3[%c0_12, %c0_13] : memref<8x128xf32, #tpu.memory_space<vmem>>, vector<8x128xf32>
    tpu.vector_store %arg3[%c0_12, %c0_13], %25 {strides = array<i32>} : memref<8x128xf32, #tpu.memory_space<vmem>>, vector<8x128xf32>,
    return
  }
  func.func @transform_0(%arg0: i32) -> (i32, i32) {
    %c0_i32 = arith.constant 0 : i32
    %c0_i32_0 = arith.constant 0 : i32
    return %c0_i32, %arg0 : i32, i32
  }
  func.func @transform_1(%arg0: i32) -> (i32, i32, i32) {
    %c0_i32 = arith.constant 0 : i32
    %c0_i32_0 = arith.constant 0 : i32
    %c0_i32_1 = arith.constant 0 : i32
    %c0_i32_2 = arith.constant 0 : i32
    return %c0_i32, %c0_i32_0, %c0_i32_1 : i32, i32, i32
  }
  func.func @transform_2(%arg0: i32) -> (i32, i32) {
    %c0_i32 = arith.constant 0 : i32
    %c0_i32_0 = arith.constant 0 : i32
    return %c0_i32, %arg0 : i32, i32
  }
}

</mosaic_0001>

<llo_original>
// kernel: tpu_custom_call.1
$region0: #{tpu_custom_call.1}
  #allocation0 [shape = 'u32[]', space=smem, size = 0x4, offset = 0x4, fixed_abs, tag = 'smem constant byte address 0x4 - core index']
  #allocation1 [shape = 'u32[144,128]{1,0:T(1,128)}', space=vmem, size = 0x12000, scoped, tag = 'internal scratch']
  %s0 = inlined_call_operand.hbm [shape: f32[12,128], index: 0, kind: input, shape index: {}]
  %s1 = inlined_call_operand.hbm [shape: f32[3,56,128], index: 1, kind: input, shape index: {}]
  %s2 = inlined_call_operand.hbm [shape: f32[8,128], index: 2, kind: output, shape index: {}]
  %s3 = sld [smem:[#allocation0]]
  $region26: #{tpu_custom_call.1} parent=0
    _
  %s5 = ssub.s32 1, %s3
  %s6 = scalar_select 0, %s5, %s3
  $region1: #{tpu_custom_call.1} parent=0
    #allocation2 [shape = 'u8[8192]{0}', space=vmem, size = 0x2000, scoped, tag = 'input window, operand 0, single buffered']
    #allocation3 [shape = 's32[1]{0}', space=sflag, size = 0x4, scoped, tag = 'scoped memory for tpu_custom_call.1']
    #allocation4 [shape = 's32[1]{0}', space=sflag, size = 0x4, scoped, tag = 'scoped memory for tpu_custom_call.1']
    #allocation5 [shape = 'u8[86016]{0}', space=vmem, size = 0x15000, scoped, tag = 'input window, operand 1, single buffered']
    #allocation6 [shape = 's32[1]{0}', space=sflag, size = 0x4, scoped, tag = 'scoped memory for tpu_custom_call.1']
    #allocation7 [shape = 'u8[4096]{0}', space=vmem, size = 0x1000, scoped, tag = 'output window, operand 0, single buffered']
    %7 = vsyncpa [#allocation3], 0
    %8 = vsyncpa [#allocation6], 0
    %9 = vsyncpa [#allocation4], 0
    // Predicated region
    $region2: #{tpu_custom_call.1} parent=1 // pred_check
      _
    $region3: #{tpu_custom_call.1} parent=1 // pred_check_branch
      %11 = sbr.rel (0) target = $region5
    $region4: #{tpu_custom_call.1} parent=1 // pred_region
      %s13 = ssub.s32 256, 256
      %14 = vsyncadd [#allocation3], %s13
      %s15 = sshll.u32 [#allocation2], 4
      %s16 = int_to_ptr.vmem [resolvable:$true] %s15
      %21 = dma.hbm_to_vmem [thread:$0]  %s0, 256, %s16, [#allocation3], 128, 128, 8
    $region5: #{tpu_custom_call.1} parent=1 // pred_fallthru
      _
    // Predicated region
    $region6: #{tpu_custom_call.1} parent=1 // pred_check
      _
    $region7: #{tpu_custom_call.1} parent=1 // pred_check_branch
      %23 = sbr.rel (0) target = $region9
    $region8: #{tpu_custom_call.1} parent=1 // pred_region
      %s25 = ssub.s32 2688, 2688
      %26 = vsyncadd [#allocation6], %s25
      %s27 = sshll.u32 [#allocation5], 4
      %s28 = int_to_ptr.vmem [resolvable:$true] %s27
      %33 = dma.hbm_to_vmem [thread:$0]  %s1, 2688, %s28, [#allocation6], 128, 128, 8
    $region9: #{tpu_custom_call.1} parent=1 // pred_fallthru
      _
    // Predicated region
    $region10: #{tpu_custom_call.1} parent=1 // pred_check
      _
    $region11: #{tpu_custom_call.1} parent=1 // pred_check_branch
      %35 = sbr.rel (0) target = $region13
    $region12: #{tpu_custom_call.1} parent=1 // pred_region
      %36 = dma.done [#allocation3], 256
    $region13: #{tpu_custom_call.1} parent=1 // pred_fallthru
      _
    // Predicated region
    $region14: #{tpu_custom_call.1} parent=1 // pred_check
      _
    $region15: #{tpu_custom_call.1} parent=1 // pred_check_branch
      %38 = sbr.rel (0) target = $region17
    $region16: #{tpu_custom_call.1} parent=1 // pred_region
      %39 = dma.done [#allocation6], 2688
    $region17: #{tpu_custom_call.1} parent=1 // pred_fallthru
      _
    %v40 = vld [vmem:[#allocation2] sm:$0xff]
    %v41 = vld [vmem:[#allocation2 + $0x8] sm:$0xf]
    %v42 = vld [vmem:[#allocation5] sm:$0xff]
    %v43 = vld [vmem:[#allocation5 + $0x8] sm:$0xff]
    %v44 = vld [vmem:[#allocation5 + $0x10] sm:$0xff]
    %v45 = vld [vmem:[#allocation5 + $0x18] sm:$0xff]
    %v46 = vld [vmem:[#allocation5 + $0x20] sm:$0xff]
    %v47 = vld [vmem:[#allocation5 + $0x28] sm:$0xff]
    %v48 = vld [vmem:[#allocation5 + $0x30] sm:$0xff]
    %50 = vset.pattern.permute.xlu0 12
    %51 = vperm.xlu0 %50, %v42
    %v52 = vpop.permute.xlu0 %51
    %55 = vset.pattern.permute.xlu0 12
    %56 = vperm.xlu0 %55, %v43
    %v57 = vpop.permute.xlu0 %56
    %60 = vset.pattern.permute.xlu0 12
    %61 = vperm.xlu0 %60, %v44
    %v62 = vpop.permute.xlu0 %61
    %65 = vset.pattern.permute.xlu0 12
    %66 = vperm.xlu0 %65, %v45
    %v67 = vpop.permute.xlu0 %66
    %70 = vset.pattern.permute.xlu0 12
    %71 = vperm.xlu0 %70, %v46
    %v72 = vpop.permute.xlu0 %71
    %75 = vset.pattern.permute.xlu0 12
    %76 = vperm.xlu0 %75, %v47
    %v77 = vpop.permute.xlu0 %76
    %80 = vset.pattern.permute.xlu0 12
    %81 = vperm.xlu0 %80, %v48
    %v82 = vpop.permute.xlu0 %81
    %vm84 = vcmask 97280
    %v85 = vsel %vm84, %v42, 0
    %v87 = vsel %vm84, %v43, 0
    %v89 = vsel %vm84, %v44, 0
    %v91 = vsel %vm84, %v45, 0
    %v93 = vsel %vm84, %v46, 0
    %v95 = vsel %vm84, %v47, 0
    %v97 = vsel %vm84, %v48, 0
    %vm99 = vcmask 1043456
    %v101 = vsel %vm99, %v41, 0
    %103 = vmatprep.subr.mxu0 0.0
    %104 = vmatpush1.msra.mxu0 %v40
    %105 = vmatprep.subr.mxu0 0.0
    %106 = vmatpush1.msra.mxu0 %v101
    %107 = vmatprep.subr.mxu0 0.0
    %108 = vmatpush1.msra.mxu0 0.0
    %109 = vmatprep.subr.mxu0 0.0
    %110 = vmatpush1.msra.mxu0 0.0
    %111 = vmatprep.subr.mxu0 0.0
    %112 = vmatpush1.msra.mxu0 0.0
    %113 = vmatprep.subr.mxu0 0.0
    %114 = vmatpush1.msra.mxu0 0.0
    %115 = vmatprep.subr.mxu0 0.0
    %116 = vmatpush1.msra.mxu0 0.0
    %117 = vmatprep.subr.mxu0 0.0
    %118 = vmatpush1.msra.mxu0 0.0
    %119 = vmatprep.subr.mxu0 0.0
    %120 = vmatpush1.msra.mxu0 0.0
    %121 = vmatprep.subr.mxu0 0.0
    %122 = vmatpush1.msra.mxu0 0.0
    %123 = vmatprep.subr.mxu0 0.0
    %124 = vmatpush1.msra.mxu0 0.0
    %125 = vmatprep.subr.mxu0 0.0
    %126 = vmatpush1.msra.mxu0 0.0
    %127 = vmatprep.subr.mxu0 0.0
    %128 = vmatpush1.msra.mxu0 0.0
    %129 = vmatprep.subr.mxu0 0.0
    %130 = vmatpush1.msra.mxu0 0.0
    %131 = vmatprep.subr.mxu0 0.0
    %132 = vmatpush1.msra.mxu0 0.0
    %133 = vmatprep.subr.mxu0 0.0
    %134 = vmatpush1.msra.mxu0 0.0
    %135 = vmatprep.subr.mxu0 0.0
    %136 = vmatpush1.msra.mxu0 0.0
    %137 = vmatprep.subr.mxu0 0.0
    %138 = vmatpush1.msra.mxu0 0.0
    %139 = vmatprep.subr.mxu0 0.0
    %140 = vmatpush1.msra.mxu0 0.0
    %141 = vmatprep.subr.mxu0 0.0
    %142 = vmatpush1.msra.mxu0 0.0
    %143 = vmatprep.subr.mxu0 0.0
    %144 = vmatpush1.msra.mxu0 0.0
    %145 = vmatprep.subr.mxu0 0.0
    %146 = vmatpush1.msra.mxu0 0.0
    %147 = vmatprep.subr.mxu0 0.0
    %148 = vmatpush1.msra.mxu0 0.0
    %149 = vmatprep.subr.mxu0 0.0
    %150 = vmatpush1.msra.mxu0 0.0
    %151 = vmatprep.subr.mxu0 0.0
    %152 = vmatpush1.msra.mxu0 0.0
    %153 = vmatprep.subr.mxu0 0.0
    %154 = vmatpush1.msra.mxu0 0.0
    %155 = vmatprep.subr.mxu0 0.0
    %156 = vmatpush1.msra.mxu0 0.0
    %157 = vmatprep.subr.mxu0 0.0
    %158 = vmatpush1.msra.mxu0 0.0
    %159 = vmatprep.subr.mxu0 0.0
    %160 = vmatpush1.msra.mxu0 0.0
    %161 = vmatprep.subr.mxu0 0.0
    %162 = vmatpush1.msra.mxu0 0.0
    %163 = vmatprep.subr.mxu0 0.0
    %164 = vmatpush1.msra.mxu0 0.0
    %165 = vmatprep.subr.mxu0 0.0
    %166 = vmatpush1.msra.mxu0 0.0
    %167 = vmatprep.mubr.f32.mxu0 0.0
    %168 = vmatmul.mubr.f32.gmra.mrb[0].mxu0 %v85
    %v169 = vpop.f32.mrb[0].mxu0
    %v170 = vadd.f32 %v52, %v169
    %v171 = vpop.f32.mrb[0].mxu0
    %172 = vmatprep.mubr.f32.mxu0 0.0
    %173 = vmatmul.mubr.f32.gmra.mrb[0].mxu0 %v87
    %v174 = vpop.f32.mrb[0].mxu0
    %v175 = vadd.f32 %v57, %v174
    %v176 = vpop.f32.mrb[0].mxu0
    %177 = vmatprep.mubr.f32.mxu0 0.0
    %178 = vmatmul.mubr.f32.gmra.mrb[0].mxu0 %v89
    %v179 = vpop.f32.mrb[0].mxu0
    %v180 = vadd.f32 %v62, %v179
    %v181 = vpop.f32.mrb[0].mxu0
    %182 = vmatprep.mubr.f32.mxu0 0.0
    %183 = vmatmul.mubr.f32.gmra.mrb[0].mxu0 %v91
    %v184 = vpop.f32.mrb[0].mxu0
    %v185 = vadd.f32 %v67, %v184
    %v186 = vpop.f32.mrb[0].mxu0
    %187 = vmatprep.mubr.f32.mxu0 0.0
    %188 = vmatmul.mubr.f32.gmra.mrb[0].mxu0 %v93
    %v189 = vpop.f32.mrb[0].mxu0
    %v190 = vadd.f32 %v72, %v189
    %v191 = vpop.f32.mrb[0].mxu0
    %192 = vmatprep.mubr.f32.mxu0 0.0
    %193 = vmatmul.mubr.f32.gmra.mrb[0].mxu0 %v95
    %v194 = vpop.f32.mrb[0].mxu0
    %v195 = vadd.f32 %v77, %v194
    %v196 = vpop.f32.mrb[0].mxu0
    %197 = vmatprep.mubr.f32.mxu0 0.0
    %198 = vmatmul.mubr.f32.gmra.mrb[0].mxu0 %v97
    %v199 = vpop.f32.mrb[0].mxu0
    %v200 = vadd.f32 %v82, %v199
    %v201 = vpop.f32.mrb[0].mxu0
    %202 = vdwg.mxu0
    %v203 = vmax.f32 %v170, 0.0
    %v204 = vmax.f32 %v175, 0.0
    %v205 = vmax.f32 %v180, 0.0
    %v206 = vmax.f32 %v185, 0.0
    %v207 = vmax.f32 %v190, 0.0
    %v208 = vmax.f32 %v195, 0.0
    %v209 = vmax.f32 %v200, 0.0
    %s210 = scalar_lea.vmem [#allocation5], 56
    %v211 = vld [vmem:[%s210] sm:$0xff]
    %v212 = vld [vmem:[%s210 + $0x8] sm:$0xff]
    %v213 = vld [vmem:[%s210 + $0x10] sm:$0xff]
    %v214 = vld [vmem:[%s210 + $0x18] sm:$0xff]
    %v215 = vld [vmem:[%s210 + $0x20] sm:$0xff]
    %v216 = vld [vmem:[%s210 + $0x28] sm:$0xff]
    %218 = vset.pattern.permute.xlu0 56
    %219 = vperm.xlu0 %218, %v211
    %v220 = vpop.permute.xlu0 %219
    %223 = vset.pattern.permute.xlu0 56
    %224 = vperm.xlu0 %223, %v212
    %v225 = vpop.permute.xlu0 %224
    %228 = vset.pattern.permute.xlu0 56
    %229 = vperm.xlu0 %228, %v213
    %v230 = vpop.permute.xlu0 %229
    %233 = vset.pattern.permute.xlu0 56
    %234 = vperm.xlu0 %233, %v214
    %v235 = vpop.permute.xlu0 %234
    %238 = vset.pattern.permute.xlu0 56
    %239 = vperm.xlu0 %238, %v215
    %v240 = vpop.permute.xlu0 %239
    %243 = vset.pattern.permute.xlu0 56
    %244 = vperm.xlu0 %243, %v216
    %v245 = vpop.permute.xlu0 %244
    %vm247 = vcmask 457728
    %v248 = vsel %vm247, %v211, 0
    %v250 = vsel %vm247, %v212, 0
    %v252 = vsel %vm247, %v213, 0
    %v254 = vsel %vm247, %v214, 0
    %v256 = vsel %vm247, %v215, 0
    %v258 = vsel %vm247, %v216, 0
    %260 = vmatprep.subr.mxu0 0.0
    %261 = vmatpush1.msra.mxu0 %v203
    %262 = vmatprep.subr.mxu0 0.0
    %263 = vmatpush1.msra.mxu0 %v204
    %264 = vmatprep.subr.mxu0 0.0
    %265 = vmatpush1.msra.mxu0 %v205
    %266 = vmatprep.subr.mxu0 0.0
    %267 = vmatpush1.msra.mxu0 %v206
    %268 = vmatprep.subr.mxu0 0.0
    %269 = vmatpush1.msra.mxu0 %v207
    %270 = vmatprep.subr.mxu0 0.0
    %271 = vmatpush1.msra.mxu0 %v208
    %272 = vmatprep.subr.mxu0 0.0
    %273 = vmatpush1.msra.mxu0 %v209
    %274 = vmatprep.subr.mxu0 0.0
    %275 = vmatpush1.msra.mxu0 0.0
    %276 = vmatprep.subr.mxu0 0.0
    %277 = vmatpush1.msra.mxu0 0.0
    %278 = vmatprep.subr.mxu0 0.0
    %279 = vmatpush1.msra.mxu0 0.0
    %280 = vmatprep.subr.mxu0 0.0
    %281 = vmatpush1.msra.mxu0 0.0
    %282 = vmatprep.subr.mxu0 0.0
    %283 = vmatpush1.msra.mxu0 0.0
    %284 = vmatprep.subr.mxu0 0.0
    %285 = vmatpush1.msra.mxu0 0.0
    %286 = vmatprep.subr.mxu0 0.0
    %287 = vmatpush1.msra.mxu0 0.0
    %288 = vmatprep.subr.mxu0 0.0
    %289 = vmatpush1.msra.mxu0 0.0
    %290 = vmatprep.subr.mxu0 0.0
    %291 = vmatpush1.msra.mxu0 0.0
    %292 = vmatprep.subr.mxu0 0.0
    %293 = vmatpush1.msra.mxu0 0.0
    %294 = vmatprep.subr.mxu0 0.0
    %295 = vmatpush1.msra.mxu0 0.0
    %296 = vmatprep.subr.mxu0 0.0
    %297 = vmatpush1.msra.mxu0 0.0
    %298 = vmatprep.subr.mxu0 0.0
    %299 = vmatpush1.msra.mxu0 0.0
    %300 = vmatprep.subr.mxu0 0.0
    %301 = vmatpush1.msra.mxu0 0.0
    %302 = vmatprep.subr.mxu0 0.0
    %303 = vmatpush1.msra.mxu0 0.0
    %304 = vmatprep.subr.mxu0 0.0
    %305 = vmatpush1.msra.mxu0 0.0
    %306 = vmatprep.subr.mxu0 0.0
    %307 = vmatpush1.msra.mxu0 0.0
    %308 = vmatprep.subr.mxu0 0.0
    %309 = vmatpush1.msra.mxu0 0.0
    %310 = vmatprep.subr.mxu0 0.0
    %311 = vmatpush1.msra.mxu0 0.0
    %312 = vmatprep.subr.mxu0 0.0
    %313 = vmatpush1.msra.mxu0 0.0
    %314 = vmatprep.subr.mxu0 0.0
    %315 = vmatpush1.msra.mxu0 0.0
    %316 = vmatprep.subr.mxu0 0.0
    %317 = vmatpush1.msra.mxu0 0.0
    %318 = vmatprep.subr.mxu0 0.0
    %319 = vmatpush1.msra.mxu0 0.0
    %320 = vmatprep.subr.mxu0 0.0
    %321 = vmatpush1.msra.mxu0 0.0
    %322 = vmatprep.subr.mxu0 0.0
    %323 = vmatpush1.msra.mxu0 0.0
    %324 = vmatprep.mubr.f32.mxu0 0.0
    %325 = vmatmul.mubr.f32.gmra.mrb[0].mxu0 %v248
    %v326 = vpop.f32.mrb[0].mxu0
    %v327 = vadd.f32 %v220, %v326
    %v328 = vpop.f32.mrb[0].mxu0
    %329 = vmatprep.mubr.f32.mxu0 0.0
    %330 = vmatmul.mubr.f32.gmra.mrb[0].mxu0 %v250
    %v331 = vpop.f32.mrb[0].mxu0
    %v332 = vadd.f32 %v225, %v331
    %v333 = vpop.f32.mrb[0].mxu0
    %334 = vmatprep.mubr.f32.mxu0 0.0
    %335 = vmatmul.mubr.f32.gmra.mrb[0].mxu0 %v252
    %v336 = vpop.f32.mrb[0].mxu0
    %v337 = vadd.f32 %v230, %v336
    %v338 = vpop.f32.mrb[0].mxu0
    %339 = vmatprep.mubr.f32.mxu0 0.0
    %340 = vmatmul.mubr.f32.gmra.mrb[0].mxu0 %v254
    %v341 = vpop.f32.mrb[0].mxu0
    %v342 = vadd.f32 %v235, %v341
    %v343 = vpop.f32.mrb[0].mxu0
    %344 = vmatprep.mubr.f32.mxu0 0.0
    %345 = vmatmul.mubr.f32.gmra.mrb[0].mxu0 %v256
    %v346 = vpop.f32.mrb[0].mxu0
    %v347 = vadd.f32 %v240, %v346
    %v348 = vpop.f32.mrb[0].mxu0
    %349 = vmatprep.mubr.f32.mxu0 0.0
    %350 = vmatmul.mubr.f32.gmra.mrb[0].mxu0 %v258
    %v351 = vpop.f32.mrb[0].mxu0
    %v352 = vadd.f32 %v245, %v351
    %v353 = vpop.f32.mrb[0].mxu0
    %354 = vdwg.mxu0
    %v355 = vmax.f32 %v327, 0.0
    %v356 = vmax.f32 %v332, 0.0
    %v357 = vmax.f32 %v337, 0.0
    %v358 = vmax.f32 %v342, 0.0
    %v359 = vmax.f32 %v347, 0.0
    %v360 = vmax.f32 %v352, 0.0
    %s361 = scalar_lea.vmem [#allocation5], 112
    %v362 = vld [vmem:[%s361] sm:$0xff]
    %364 = vset.pattern.permute.xlu0 48
    %365 = vperm.xlu0 %364, %v362
    %v366 = vpop.permute.xlu0 %365
    %vm368 = vcmask 392192
    %v369 = vsel %vm368, %v362, 0
    %371 = vmatprep.subr.mxu0 0.0
    %372 = vmatpush1.msra.mxu0 %v355
    %373 = vmatprep.subr.mxu0 0.0
    %374 = vmatpush1.msra.mxu0 %v356
    %375 = vmatprep.subr.mxu0 0.0
    %376 = vmatpush1.msra.mxu0 %v357
    %377 = vmatprep.subr.mxu0 0.0
    %378 = vmatpush1.msra.mxu0 %v358
    %379 = vmatprep.subr.mxu0 0.0
    %380 = vmatpush1.msra.mxu0 %v359
    %381 = vmatprep.subr.mxu0 0.0
    %382 = vmatpush1.msra.mxu0 %v360
    %383 = vmatprep.subr.mxu0 0.0
    %384 = vmatpush1.msra.mxu0 0.0
    %385 = vmatprep.subr.mxu0 0.0
    %386 = vmatpush1.msra.mxu0 0.0
    %387 = vmatprep.subr.mxu0 0.0
    %388 = vmatpush1.msra.mxu0 0.0
    %389 = vmatprep.subr.mxu0 0.0
    %390 = vmatpush1.msra.mxu0 0.0
    %391 = vmatprep.subr.mxu0 0.0
    %392 = vmatpush1.msra.mxu0 0.0
    %393 = vmatprep.subr.mxu0 0.0
    %394 = vmatpush1.msra.mxu0 0.0
    %395 = vmatprep.subr.mxu0 0.0
    %396 = vmatpush1.msra.mxu0 0.0
    %397 = vmatprep.subr.mxu0 0.0
    %398 = vmatpush1.msra.mxu0 0.0
    %399 = vmatprep.subr.mxu0 0.0
    %400 = vmatpush1.msra.mxu0 0.0
    %401 = vmatprep.subr.mxu0 0.0
    %402 = vmatpush1.msra.mxu0 0.0
    %403 = vmatprep.subr.mxu0 0.0
    %404 = vmatpush1.msra.mxu0 0.0
    %405 = vmatprep.subr.mxu0 0.0
    %406 = vmatpush1.msra.mxu0 0.0
    %407 = vmatprep.subr.mxu0 0.0
    %408 = vmatpush1.msra.mxu0 0.0
    %409 = vmatprep.subr.mxu0 0.0
    %410 = vmatpush1.msra.mxu0 0.0
    %411 = vmatprep.subr.mxu0 0.0
    %412 = vmatpush1.msra.mxu0 0.0
    %413 = vmatprep.subr.mxu0 0.0
    %414 = vmatpush1.msra.mxu0 0.0
    %415 = vmatprep.subr.mxu0 0.0
    %416 = vmatpush1.msra.mxu0 0.0
    %417 = vmatprep.subr.mxu0 0.0
    %418 = vmatpush1.msra.mxu0 0.0
    %419 = vmatprep.subr.mxu0 0.0
    %420 = vmatpush1.msra.mxu0 0.0
    %421 = vmatprep.subr.mxu0 0.0
    %422 = vmatpush1.msra.mxu0 0.0
    %423 = vmatprep.subr.mxu0 0.0
    %424 = vmatpush1.msra.mxu0 0.0
    %425 = vmatprep.subr.mxu0 0.0
    %426 = vmatpush1.msra.mxu0 0.0
    %427 = vmatprep.subr.mxu0 0.0
    %428 = vmatpush1.msra.mxu0 0.0
    %429 = vmatprep.subr.mxu0 0.0
    %430 = vmatpush1.msra.mxu0 0.0
    %431 = vmatprep.subr.mxu0 0.0
    %432 = vmatpush1.msra.mxu0 0.0
    %433 = vmatprep.subr.mxu0 0.0
    %434 = vmatpush1.msra.mxu0 0.0
    %435 = vmatprep.mubr.f32.mxu0 0.0
    %436 = vmatmul.mubr.f32.gmra.mrb[0].mxu0 %v369
    %v437 = vpop.f32.mrb[0].mxu0
    %v438 = vadd.f32 %v366, %v437
    %v439 = vpop.f32.mrb[0].mxu0
    %440 = vdwg.mxu0
    %441 = vst [vmem:[#allocation7] sm:$0xff] %v438
    // Predicated region
    $region18: #{tpu_custom_call.1} parent=1 // pred_check
      _
    $region19: #{tpu_custom_call.1} parent=1 // pred_check_branch
      %443 = sbr.rel (0) target = $region21
    $region20: #{tpu_custom_call.1} parent=1 // pred_region
      %s445 = ssub.s32 128, 128
      %446 = vsyncadd [#allocation4], %s445
      %s448 = sshll.u32 [#allocation7], 4
      %s449 = int_to_ptr.vmem [resolvable:$true] %s448
      %451 = dma.vmem_to_hbm [thread:$0]  %s449, 128, %s2, [#allocation4]
    $region21: #{tpu_custom_call.1} parent=1 // pred_fallthru
      _
    // Predicated region
    $region22: #{tpu_custom_call.1} parent=1 // pred_check
      _
    $region23: #{tpu_custom_call.1} parent=1 // pred_check_branch
      %453 = sbr.rel (0) target = $region25
    $region24: #{tpu_custom_call.1} parent=1 // pred_region
      %454 = dma.done [#allocation4], 128
    $region25: #{tpu_custom_call.1} parent=1 // pred_fallthru
      _
    %455 = vsyncpa [#allocation3], 1
    %456 = vsyncpa [#allocation6], 1
    %457 = vsyncpa [#allocation4], 1

</llo_original>
